<compile_context>
chip_gen: v5e
topology: v5e:2x2
jax: 0.10.0
libtpu: 0.0.40
codegen_flags: <defaults>
</compile_context>

<pallas_src>
import functools

import jax
import jax.numpy as jnp
import numpy as np
from jax import lax
from jax.experimental import pallas as pl
from jax.experimental.pallas import tpu as pltpu


# ---------------------------------------------------------------------------
# tiling / VMEM helpers
# ---------------------------------------------------------------------------

def _tile(size, target, align, *, max_fallback=None):
    """Largest tile <= target that divides `size` and is a multiple of `align`.

    Falls back to the full dimension, but refuses to do so silently if the
    full dimension would exceed `max_fallback` (VMEM-blowup guard)."""
    if size <= target:
        return size
    t = (target // align) * align
    while t >= align:
        if size % t == 0:
            return t
        t -= align
    if max_fallback is not None and size > max_fallback:
        # TODO(synk): pad-and-mask instead of erroring for awkward shapes.
        raise ValueError(
            f"No {align}-aligned tile <= {target} divides {size}; the "
            f"full-dimension fallback ({size}) exceeds the safety cap "
            f"{max_fallback}. Pad the input to a tileable size.")
    return size


def _vmem_capacity_bytes(default=64 * 1024 * 1024):
    """Physical VMEM per TensorCore (v5e/v6e: 128 MiB, v7x: 64 MiB)."""
    try:
        info = pltpu.get_tpu_info()
        cap = getattr(info, "vmem_capacity_bytes", None)
        if cap:
            return int(cap)
    except Exception:
        pass
    return default


def _vmem_limit_bytes():
    cap = _vmem_capacity_bytes()
    return min((cap * 3) // 4, 64 * 1024 * 1024)


def _fused_fits_vmem(n_seq, dim, heads, dim_head, budget_bytes=None):
    """Rough check: can one fused per-(batch, q-tile) step live in VMEM?"""
    if budget_bytes is None:
        # Leave generous headroom for double-buffered blocks + compiler temps.
        budget_bytes = _vmem_capacity_bytes() // 8
    inner = heads * dim_head
    work = n_seq * (2 * dim + 4 * inner) + 2 * n_seq * n_seq
    weights = dim * inner + dim * 2 * inner + inner * dim + dim
    return 4 * (2 * work + weights) <= budget_bytes


# ---------------------------------------------------------------------------
# Pallas kernels
# ---------------------------------------------------------------------------

def _linear_kernel(x_ref, w_ref, o_ref):
    # (tm, tk) @ (tk, tn) accumulated over the K grid axis directly into the
    # resident f32 output block (no separate VMEM accumulator scratch).
    k = pl.program_id(2)

    @pl.when(k == 0)
    def _():
        o_ref[...] = jnp.zeros_like(o_ref)

    o_ref[...] += jnp.dot(x_ref[...], w_ref[...],
                          preferred_element_type=jnp.float32)


def _linear_bias_kernel(x_ref, w_ref, b_ref, o_ref):
    k = pl.program_id(2)

    @pl.when(k == 0)
    def _():
        o_ref[...] = jnp.zeros_like(o_ref)

    o_ref[...] += jnp.dot(x_ref[...], w_ref[...],
                          preferred_element_type=jnp.float32)

    @pl.when(k == pl.num_programs(2) - 1)
    def _():
        o_ref[...] += b_ref[...]


def _flash_attn_kernel(q_ref, k_ref, v_ref, o_ref, m_sc, l_sc, acc_sc, *,
                       heads, dim_head, mxu_dtype):
    """Online-softmax attention over one (q block, k block) pair, all heads.

    q_ref:(Tq, H*D)  k_ref/v_ref:(Tk, H*D)  o_ref:(Tq, H*D)
    m_sc:(H, Tq, 1)  l_sc:(H, Tq, 1)  acc_sc:(Tq, H*D)  (f32 VMEM scratch,
    lane-dense accumulator; the scale is pre-folded into the q projection)."""
    ki = pl.program_id(2)
    bq = acc_sc.shape[0]

    @pl.when(ki == 0)
    def _():
        m_sc[...] = jnp.full(m_sc.shape, -jnp.inf, m_sc.dtype)
        l_sc[...] = jnp.zeros(l_sc.shape, l_sc.dtype)
        acc_sc[...] = jnp.zeros(acc_sc.shape, acc_sc.dtype)

    q = q_ref[...]
    k = k_ref[...]
    v = v_ref[...]
    if q.dtype != mxu_dtype:
        # Only the MXU operands are narrowed; all elementwise math stays f32
        # (v5e has no bf16 VPU/EUP), accumulation stays f32.
        q = q.astype(mxu_dtype)
        k = k.astype(mxu_dtype)
        v = v.astype(mxu_dtype)

    # Contract the head dim of both operands directly (no transposed K copy).
    contract_last = (((1,), (1,)), ((), ()))

    for h in range(heads):                      # static unroll; heads is small
        sl = slice(h * dim_head, (h + 1) * dim_head)
        s = lax.dot_general(q[:, sl], k[:, sl], contract_last,
                            preferred_element_type=jnp.float32)   # (Tq, Tk)

        m_prev = m_sc[h]                                          # (Tq, 1)
        m_new = jnp.maximum(m_prev, jnp.max(s, axis=-1, keepdims=True))
        alpha = jnp.exp(m_prev - m_new)                           # (Tq, 1)
        p = jnp.exp(s - m_new)                                    # (Tq, Tk) f32

        l_sc[h] = alpha * l_sc[h] + jnp.sum(p, axis=-1, keepdims=True)
        pv = jnp.dot(p.astype(mxu_dtype), v[:, sl],
                     preferred_element_type=jnp.float32)          # (Tq, D)
        acc_sc[:, sl] = alpha * acc_sc[:, sl] + pv
        m_sc[h] = m_new

    @pl.when(ki == pl.num_programs(2) - 1)
    def _():
        # Deferred 1/l normalization; one lane-dense full-tile store.
        inv = jnp.concatenate(
            [jnp.broadcast_to(pl.reciprocal(l_sc[h], approx=False),
                              (bq, dim_head))
             for h in range(heads)], axis=-1)                     # (Tq, H*D)
        o_ref[...] = (acc_sc[...] * inv).astype(o_ref.dtype)


def _fused_attention_kernel(xq_ref, xc_ref, wq_ref, wkv_ref, wo_ref, bo_ref,
                            o_ref, *, heads, dim_head):
    """Whole Attention.forward for one (batch, q-row tile), resident in VMEM.

    The softmax scale is pre-folded into wq by the wrapper."""
    inner = heads * dim_head
    xq = xq_ref[...].astype(jnp.float32)                           # (Tq, dim)
    xc = xc_ref[...].astype(jnp.float32)                           # (N, dim)

    q = jnp.dot(xq, wq_ref[...], preferred_element_type=jnp.float32)
    kv = jnp.dot(xc, wkv_ref[...], preferred_element_type=jnp.float32)
    k = kv[:, :inner]
    v = kv[:, inner:]

    contract_last = (((1,), (1,)), ((), ()))
    outs = []
    for h in range(heads):
        sl = slice(h * dim_head, (h + 1) * dim_head)
        s = lax.dot_general(q[:, sl], k[:, sl], contract_last,
                            preferred_element_type=jnp.float32)   # (Tq, N)
        m = jnp.max(s, axis=-1, keepdims=True)
        p = jnp.exp(s - m)
        l = jnp.sum(p, axis=-1, keepdims=True)
        oh = jnp.dot(p, v[:, sl], preferred_element_type=jnp.float32)
        outs.append(oh * pl.reciprocal(l, approx=False))
    attn_out = jnp.concatenate(outs, axis=-1)                      # (Tq, H*D)

    y = jnp.dot(attn_out, wo_ref[...],
                preferred_element_type=jnp.float32) + bo_ref[...]
    o_ref[...] = y.astype(o_ref.dtype)


# ---------------------------------------------------------------------------
# pallas_call wrappers
# ---------------------------------------------------------------------------

def linear_pallas(x2d, w, b=None, *, block_m=None, block_n=None, block_k=None):
    """x2d: (M, K), w: (K, N), optional b: (N,)  ->  (M, N), f32."""
    M, K = x2d.shape
    K2, N = w.shape
    assert K == K2

    tm = _tile(M, block_m or 256, 8, max_fallback=4096)
    tn = _tile(N, block_n or 512, 128, max_fallback=4096)
    tk = _tile(K, block_k or 512, 128, max_fallback=8192)
    grid = (M // tm, N // tn, K // tk)

    x_spec = pl.BlockSpec((tm, tk), lambda i, j, k: (i, k))
    w_spec = pl.BlockSpec((tk, tn), lambda i, j, k: (k, j))
    o_spec = pl.BlockSpec((tm, tn), lambda i, j, k: (i, j))
    out_shape = jax.ShapeDtypeStruct((M, N), jnp.float32)
    cparams = pltpu.CompilerParams(
        dimension_semantics=("parallel", "parallel", "arbitrary"),
        vmem_limit_bytes=_vmem_limit_bytes())

    if b is None:
        return pl.pallas_call(
            _linear_kernel,
            out_shape=out_shape,
            grid_spec=pltpu.PrefetchScalarGridSpec(
                num_scalar_prefetch=0, grid=grid,
                in_specs=[x_spec, w_spec], out_specs=o_spec),
            compiler_params=cparams,
        )(x2d, w)

    b_spec = pl.BlockSpec((1, tn), lambda i, j, k: (0, j))
    return pl.pallas_call(
        _linear_bias_kernel,
        out_shape=out_shape,
        grid_spec=pltpu.PrefetchScalarGridSpec(
            num_scalar_prefetch=0, grid=grid,
            in_specs=[x_spec, w_spec, b_spec], out_specs=o_spec),
        compiler_params=cparams,
    )(x2d, w, b.reshape(1, N))


def flash_attention_pallas(q, k, v, heads, dim_head, *,
                           block_q=None, block_k=None, mxu_dtype=jnp.float32):
    """q: (B, Nq, H*D), k/v: (B, Nk, H*D)  ->  (B, Nq, H*D), f32.

    `mxu_dtype=jnp.bfloat16` narrows only the matmul operands (f32 accumulate);
    recommended for production on all generations, default f32 for validation."""
    B, Nq, inner = q.shape
    _, Nk, _ = k.shape
    assert inner == heads * dim_head

    bq = _tile(Nq, block_q or 256, 8, max_fallback=2048)
    bk = _tile(Nk, block_k or 256, 8, max_fallback=2048)
    grid = (B, Nq // bq, Nk // bk)

    qo_map = lambda b, qi, ki: (b, qi, 0)
    kv_map = lambda b, qi, ki: (b, ki, 0)

    kernel = functools.partial(_flash_attn_kernel, heads=heads,
                               dim_head=dim_head, mxu_dtype=mxu_dtype)

    n_q_tiles = Nq // bq
    cost = pl.CostEstimate(
        flops=4 * B * heads * Nq * Nk * dim_head,
        transcendentals=B * heads * Nq * Nk,
        # each k/v block is streamed once per q tile
        bytes_accessed=4 * (q.size + (k.size + v.size) * n_q_tiles
                            + B * Nq * inner))

    return pl.pallas_call(
        kernel,
        out_shape=jax.ShapeDtypeStruct((B, Nq, inner), jnp.float32),
        grid_spec=pltpu.PrefetchScalarGridSpec(
            num_scalar_prefetch=0,
            grid=grid,
            in_specs=[
                pl.BlockSpec((pl.Squeezed(), bq, inner), qo_map),
                pl.BlockSpec((pl.Squeezed(), bk, inner), kv_map),
                pl.BlockSpec((pl.Squeezed(), bk, inner), kv_map),
            ],
            out_specs=pl.BlockSpec((pl.Squeezed(), bq, inner), qo_map),
            scratch_shapes=[
                pltpu.VMEM((heads, bq, 1), jnp.float32),   # running max
                pltpu.VMEM((heads, bq, 1), jnp.float32),   # running denom
                pltpu.VMEM((bq, inner), jnp.float32),      # lane-dense acc
            ],
        ),
        compiler_params=pltpu.CompilerParams(
            dimension_semantics=("parallel", "parallel", "arbitrary"),
            vmem_limit_bytes=_vmem_limit_bytes()),
        cost_estimate=cost,
    )(q, k, v)


def fused_attention_pallas(x, wq_scaled, wkv, wo, bo, heads, dim_head, *,
                           block_q=None):
    """Single pallas_call for the whole forward, grid = (B, N // Tq).

    The extra q-row tile axis keeps both v7x TensorCores busy when B is small
    (each tile recomputes the K/V projection over the full context)."""
    B, N, dim = x.shape
    inner = heads * dim_head

    if block_q is not None:
        tq = _tile(N, block_q, 8)
    elif B >= 2 or N < 16:
        tq = N                                   # batch axis already parallel
    else:
        tq = _tile(N, max(8, N // 2), 8)         # split sequence across cores
    grid = (B, N // tq)

    kernel = functools.partial(_fused_attention_kernel, heads=heads,
                               dim_head=dim_head)
    return pl.pallas_call(
        kernel,
        out_shape=jax.ShapeDtypeStruct((B, N, dim), jnp.float32),
        grid_spec=pltpu.PrefetchScalarGridSpec(
            num_scalar_prefetch=0,
            grid=grid,
            in_specs=[
                pl.BlockSpec((pl.Squeezed(), tq, dim), lambda b, t: (b, t, 0)),
                pl.BlockSpec((pl.Squeezed(), N, dim), lambda b, t: (b, 0, 0)),
                pl.BlockSpec((dim, inner), lambda b, t: (0, 0)),
                pl.BlockSpec((dim, 2 * inner), lambda b, t: (0, 0)),
                pl.BlockSpec((inner, dim), lambda b, t: (0, 0)),
                pl.BlockSpec((1, dim), lambda b, t: (0, 0)),
            ],
            out_specs=pl.BlockSpec((pl.Squeezed(), tq, dim),
                                   lambda b, t: (b, t, 0)),
        ),
        compiler_params=pltpu.CompilerParams(
            dimension_semantics=("parallel", "parallel"),
            vmem_limit_bytes=_vmem_limit_bytes()),
    )(x, x, wq_scaled, wkv, wo, bo.reshape(1, dim))


# ---------------------------------------------------------------------------
# Attention.forward (context=None supported as in the module; masks TODO)
# ---------------------------------------------------------------------------

def attention_forward(x, params, heads, dim_head, context=None, fuse=None,
                      attn_block_q=None, attn_block_k=None,
                      lin_block_m=None, lin_block_n=None, lin_block_k=None,
                      mxu_dtype=jnp.float32):
    """Attention.forward with mask=None, context_mask=None, dropout=0."""
    # TODO(synk): mask / context_mask branch of the PyTorch module not implemented.
    B, N, dim = x.shape
    inner = heads * dim_head
    scale = float(dim_head) ** (-0.5)

    # Fold the softmax scale into the query projection weight once (exact):
    # removes the O(Tq*H*D) per-key-block rescale inside the attention kernel.
    wq_scaled = params["wq"] * scale

    ctx = x if context is None else context
    Bc, Nc, dimc = ctx.shape
    assert Bc == B and dimc == dim

    if fuse is None:
        fuse = (context is None) and _fused_fits_vmem(N, dim, heads, dim_head)
    if fuse and context is None:
        return fused_attention_pallas(x, wq_scaled, params["wkv"],
                                      params["wo"], params["bo"],
                                      heads, dim_head)

    # --- projections (gridded, pipelined Pallas matmuls) ---
    x2d = x.reshape(B * N, dim)
    c2d = ctx.reshape(B * Nc, dim)
    q2d = linear_pallas(x2d, wq_scaled, block_m=lin_block_m,
                        block_n=lin_block_n, block_k=lin_block_k)
    kv2d = linear_pallas(c2d, params["wkv"], block_m=lin_block_m,
                         block_n=lin_block_n, block_k=lin_block_k)

    # lane-dense (B, N, H*D) layout; reshapes only, no transposes.
    q = q2d.reshape(B, N, inner)
    k = kv2d[:, :inner].reshape(B, Nc, inner)
    v = kv2d[:, inner:].reshape(B, Nc, inner)

    # --- flash attention core ---
    out = flash_attention_pallas(q, k, v, heads, dim_head,
                                 block_q=attn_block_q, block_k=attn_block_k,
                                 mxu_dtype=mxu_dtype)

    # --- output projection (with bias) ---
    y2d = linear_pallas(out.reshape(B * N, inner), params["wo"], params["bo"],
                        block_m=lin_block_m, block_n=lin_block_n,
                        block_k=lin_block_k)
    return y2d.reshape(B, N, dim)


# ---------------------------------------------------------------------------
# Pure-JAX reference (mirrors the PyTorch forward) for validation
# ---------------------------------------------------------------------------

def attention_reference(x, params, heads, dim_head, context=None):
    B, N, dim = x.shape
    inner = heads * dim_head
    scale = dim_head ** (-0.5)
    ctx = x if context is None else context

    q = x @ params["wq"]
    kv = ctx @ params["wkv"]
    k, v = kv[..., :inner], kv[..., inner:]

    def split_heads(t):
        b, n = t.shape[:2]
        return t.reshape(b, n, heads, dim_head).transpose(0, 2, 1, 3)

    q, k, v = map(split_heads, (q, k, v))
    dots = jnp.einsum("bhid,bhjd->bhij", q, k) * scale
    attn = jax.nn.softmax(dots, axis=-1)
    out = jnp.einsum("bhij,bhjd->bhid", attn, v)
    out = out.transpose(0, 2, 1, 3).reshape(B, N, inner)
    return out @ params["wo"] + params["bo"]


# ---------------------------------------------------------------------------
# Main
# ---------------------------------------------------------------------------

if __name__ == "__main__":
    def init(key, shape, fan_in):
        bound = 1.0 / np.sqrt(fan_in)
        return jax.random.uniform(key, shape, jnp.float32, -bound, bound)

    def make_params(key, dim, heads, dim_head):
        inner = heads * dim_head
        kq, kkv, kwo, kbo = jax.random.split(key, 4)
        return {
            "wq": init(kq, (dim, inner), dim),          # to_q (no bias)
            "wkv": init(kkv, (dim, 2 * inner), dim),    # to_kv (no bias)
            "wo": init(kwo, (inner, dim), inner),       # to_out weight
            "bo": init(kbo, (dim,), inner),             # to_out bias
        }

    # Tolerance note: the flash formulation defers the softmax normalization
    # (acc/l) and folds the scale into wq, which reassociates the math w.r.t.
    # the reference; combined with the TPU MXU's default-precision matmul this
    # is a ~1e-4-level difference, so we check at 2e-3.
    RTOL = ATOL = 2e-3

    root = jax.random.PRNGKey(0)
    key1, key2 = jax.random.split(root)

    # --- Test 1: small module-consistent shapes; fused + tiled paths. ---
    B, N, dim, heads, dim_head = 2, 8, 32, 2, 16
    kx, kp = jax.random.split(key1)
    x = jax.random.normal(kx, (B, N, dim), jnp.float32)
    params = make_params(kp, dim, heads, dim_head)

    y_fused = jax.block_until_ready(
        attention_forward(x, params, heads, dim_head, fuse=True))
    y_tiled = jax.block_until_ready(
        attention_forward(x, params, heads, dim_head, fuse=False))
    y_ref = attention_reference(x, params, heads, dim_head)
    np.testing.assert_allclose(np.asarray(y_fused), np.asarray(y_ref),
                               rtol=RTOL, atol=ATOL)
    np.testing.assert_allclose(np.asarray(y_tiled), np.asarray(y_ref),
                               rtol=RTOL, atol=ATOL)

    # --- Test 2: exercise multi-block flash accumulation + tiled projections. ---
    B2, N2, dim2, heads2, dim_head2 = 2, 64, 256, 4, 16
    kx2, kp2 = jax.random.split(key2)
    x2 = jax.random.normal(kx2, (B2, N2, dim2), jnp.float32)
    params2 = make_params(kp2, dim2, heads2, dim_head2)

    y2 = attention_forward(x2, params2, heads2, dim_head2, fuse=False,
                           attn_block_q=16, attn_block_k=16,
                           lin_block_m=32, lin_block_k=128)
    y2 = jax.block_until_ready(y2)
    y2_ref = attention_reference(x2, params2, heads2, dim_head2)
    np.testing.assert_allclose(np.asarray(y2), np.asarray(y2_ref),
                               rtol=RTOL, atol=ATOL)

    print("KERNEL_OK")
</pallas_src>

<mosaic_0001>
module attributes {stable_mosaic.version = 11 : i64} {
  func.func @_fused_attention_kernel(%arg0: i32, %arg1: i32, %arg2: memref<1x8x32xf32, #tpu.memory_space<vmem>>, %arg3: memref<1x8x32xf32, #tpu.memory_space<vmem>>, %arg4: memref<32x32xf32, #tpu.memory_space<vmem>>, %arg5: memref<32x64xf32, #tpu.memory_space<vmem>>, %arg6: memref<32x32xf32, #tpu.memory_space<vmem>>, %arg7: memref<1x32xf32, #tpu.memory_space<vmem>>, %arg8: memref<1x8x32xf32, #tpu.memory_space<vmem>>) attributes {dimension_semantics = [#tpu.dimension_semantics<parallel>, #tpu.dimension_semantics<parallel>], iteration_bounds = array<i64: 2, 1>, scalar_prefetch = 0 : i64, scratch_operands = 0 : i64, tpu.core_type = #tpu.core_type<tc>, window_params = [{transform_indices = @transform_0, window_bounds = array<i64: 1, 8, 32>}, {transform_indices = @transform_1, window_bounds = array<i64: 1, 8, 32>}, {pipeline_mode = #tpu.pipeline_mode<synchronous>, transform_indices = @transform_2, window_bounds = array<i64: 32, 32>}, {pipeline_mode = #tpu.pipeline_mode<synchronous>, transform_indices = @transform_3, window_bounds = array<i64: 32, 64>}, {pipeline_mode = #tpu.pipeline_mode<synchronous>, transform_indices = @transform_4, window_bounds = array<i64: 32, 32>}, {pipeline_mode = #tpu.pipeline_mode<synchronous>, transform_indices = @transform_5, window_bounds = array<i64: 1, 32>}, {transform_indices = @transform_6, window_bounds = array<i64: 1, 8, 32>}]} {
    %c0 = arith.constant 0 : index
    %c0_0 = arith.constant 0 : index
    %c0_1 = arith.constant 0 : index
    %0 = vector.load %arg2[%c0, %c0_0, %c0_1] : memref<1x8x32xf32, #tpu.memory_space<vmem>>, vector<1x8x32xf32>
    %1 = vector.shape_cast %0 : vector<1x8x32xf32> to vector<8x32xf32>
    %c0_2 = arith.constant 0 : index
    %c0_3 = arith.constant 0 : index
    %c0_4 = arith.constant 0 : index
    %2 = vector.load %arg3[%c0_2, %c0_3, %c0_4] : memref<1x8x32xf32, #tpu.memory_space<vmem>>, vector<1x8x32xf32>
    %3 = vector.shape_cast %2 : vector<1x8x32xf32> to vector<8x32xf32>
    %c0_5 = arith.constant 0 : index
    %c0_6 = arith.constant 0 : index
    %4 = vector.load %arg4[%c0_5, %c0_6] : memref<32x32xf32, #tpu.memory_space<vmem>>, vector<32x32xf32>
    %cst = arith.constant dense<0.000000e+00> : vector<8x32xf32>
    %5 = tpu.matmul %1, %4, %cst {dimension_numbers = #tpu.dot_dimension_numbers<[1], [0], [0], [1], [0, 0, 1, 1], [], []>} : vector<8x32xf32>, vector<32x32xf32>, vector<8x32xf32> -> vector<8x32xf32>
    %c0_7 = arith.constant 0 : index
    %c0_8 = arith.constant 0 : index
    %6 = vector.load %arg5[%c0_7, %c0_8] : memref<32x64xf32, #tpu.memory_space<vmem>>, vector<32x64xf32>
    %cst_9 = arith.constant dense<0.000000e+00> : vector<8x64xf32>
    %7 = tpu.matmul %3, %6, %cst_9 {dimension_numbers = #tpu.dot_dimension_numbers<[1], [0], [0], [1], [0, 0, 1, 1], [], []>} : vector<8x32xf32>, vector<32x64xf32>, vector<8x64xf32> -> vector<8x64xf32>
    %8 = vector.extract_strided_slice %7 {offsets = [0, 0], sizes = [8, 32], strides = [1, 1]} : vector<8x64xf32> to vector<8x32xf32>
    %9 = vector.extract_strided_slice %7 {offsets = [0, 32], sizes = [8, 32], strides = [1, 1]} : vector<8x64xf32> to vector<8x32xf32>
    %10 = vector.extract_strided_slice %5 {offsets = [0, 0], sizes = [8, 16], strides = [1, 1]} : vector<8x32xf32> to vector<8x16xf32>
    %11 = vector.extract_strided_slice %8 {offsets = [0, 0], sizes = [8, 16], strides = [1, 1]} : vector<8x32xf32> to vector<8x16xf32>
    %cst_10 = arith.constant dense<0.000000e+00> : vector<8x8xf32>
    %12 = tpu.matmul %10, %11, %cst_10 {dimension_numbers = #tpu.dot_dimension_numbers<[1], [1], [0], [0], [0, 0, 1, 0], [], []>} : vector<8x16xf32>, vector<8x16xf32>, vector<8x8xf32> -> vector<8x8xf32>
    %cst_11 = arith.constant dense<0xFF800000> : vector<8xf32>
    %13 = vector.multi_reduction <maximumf>, %12, %cst_11 [1] : vector<8x8xf32> to vector<8xf32>
    %14 = vector.shape_cast %13 : vector<8xf32> to vector<8x1xf32>
    %15 = vector.broadcast %14 : vector<8x1xf32> to vector<8x8xf32>
    %16 = arith.subf %12, %15 : vector<8x8xf32>
    %17 = math.exp %16 : vector<8x8xf32>
    %cst_12 = arith.constant dense<0.000000e+00> : vector<8xf32>
    %18 = vector.multi_reduction <add>, %17, %cst_12 [1] : vector<8x8xf32> to vector<8xf32>
    %19 = vector.shape_cast %18 : vector<8xf32> to vector<8x1xf32>
    %20 = vector.extract_strided_slice %9 {offsets = [0, 0], sizes = [8, 16], strides = [1, 1]} : vector<8x32xf32> to vector<8x16xf32>
    %cst_13 = arith.constant dense<0.000000e+00> : vector<8x16xf32>
    %21 = tpu.matmul %17, %20, %cst_13 {dimension_numbers = #tpu.dot_dimension_numbers<[1], [0], [0], [1], [0, 0, 1, 1], [], []>} : vector<8x8xf32>, vector<8x16xf32>, vector<8x16xf32> -> vector<8x16xf32>
    %22 = tpu.reciprocal %19 : vector<8x1xf32> -> vector<8x1xf32>
    %23 = vector.broadcast %22 : vector<8x1xf32> to vector<8x16xf32>
    %24 = arith.mulf %21, %23 : vector<8x16xf32>
    %25 = vector.extract_strided_slice %5 {offsets = [0, 16], sizes = [8, 16], strides = [1, 1]} : vector<8x32xf32> to vector<8x16xf32>
    %26 = vector.extract_strided_slice %8 {offsets = [0, 16], sizes = [8, 16], strides = [1, 1]} : vector<8x32xf32> to vector<8x16xf32>
    %cst_14 = arith.constant dense<0.000000e+00> : vector<8x8xf32>
    %27 = tpu.matmul %25, %26, %cst_14 {dimension_numbers = #tpu.dot_dimension_numbers<[1], [1], [0], [0], [0, 0, 1, 0], [], []>} : vector<8x16xf32>, vector<8x16xf32>, vector<8x8xf32> -> vector<8x8xf32>
    %cst_15 = arith.constant dense<0xFF800000> : vector<8xf32>
    %28 = vector.multi_reduction <maximumf>, %27, %cst_15 [1] : vector<8x8xf32> to vector<8xf32>
    %29 = vector.shape_cast %28 : vector<8xf32> to vector<8x1xf32>
    %30 = vector.broadcast %29 : vector<8x1xf32> to vector<8x8xf32>
    %31 = arith.subf %27, %30 : vector<8x8xf32>
    %32 = math.exp %31 : vector<8x8xf32>
    %cst_16 = arith.constant dense<0.000000e+00> : vector<8xf32>
    %33 = vector.multi_reduction <add>, %32, %cst_16 [1] : vector<8x8xf32> to vector<8xf32>
    %34 = vector.shape_cast %33 : vector<8xf32> to vector<8x1xf32>
    %35 = vector.extract_strided_slice %9 {offsets = [0, 16], sizes = [8, 16], strides = [1, 1]} : vector<8x32xf32> to vector<8x16xf32>
    %cst_17 = arith.constant dense<0.000000e+00> : vector<8x16xf32>
    %36 = tpu.matmul %32, %35, %cst_17 {dimension_numbers = #tpu.dot_dimension_numbers<[1], [0], [0], [1], [0, 0, 1, 1], [], []>} : vector<8x8xf32>, vector<8x16xf32>, vector<8x16xf32> -> vector<8x16xf32>
    %37 = tpu.reciprocal %34 : vector<8x1xf32> -> vector<8x1xf32>
    %38 = vector.broadcast %37 : vector<8x1xf32> to vector<8x16xf32>
    %39 = arith.mulf %36, %38 : vector<8x16xf32>
    %40 = tpu.concatenate %24, %39 in 1 : vector<8x16xf32>, vector<8x16xf32> -> vector<8x32xf32>
    %c0_18 = arith.constant 0 : index
    %c0_19 = arith.constant 0 : index
    %41 = vector.load %arg6[%c0_18, %c0_19] : memref<32x32xf32, #tpu.memory_space<vmem>>, vector<32x32xf32>
    %cst_20 = arith.constant dense<0.000000e+00> : vector<8x32xf32>
    %42 = tpu.matmul %40, %41, %cst_20 {dimension_numbers = #tpu.dot_dimension_numbers<[1], [0], [0], [1], [0, 0, 1, 1], [], []>} : vector<8x32xf32>, vector<32x32xf32>, vector<8x32xf32> -> vector<8x32xf32>
    %c0_21 = arith.constant 0 : index
    %c0_22 = arith.constant 0 : index
    %43 = vector.load %arg7[%c0_21, %c0_22] : memref<1x32xf32, #tpu.memory_space<vmem>>, vector<1x32xf32>
    %44 = vector.broadcast %43 : vector<1x32xf32> to vector<8x32xf32>
    %45 = arith.addf %42, %44 : vector<8x32xf32>
    %c0_23 = arith.constant 0 : index
    %c0_24 = arith.constant 0 : index
    %c0_25 = arith.constant 0 : index
    %46 = vector.load %arg8[%c0_23, %c0_24, %c0_25] : memref<1x8x32xf32, #tpu.memory_space<vmem>>, vector<1x8x32xf32>
    %47 = vector.shape_cast %46 : vector<1x8x32xf32> to vector<8x32xf32>
    %48 = vector.shape_cast %45 : vector<8x32xf32> to vector<1x8x32xf32>
    tpu.vector_store %arg8[%c0_23, %c0_24, %c0_25], %48 {strides = array<i32>} : memref<1x8x32xf32, #tpu.memory_space<vmem>>, vector<1x8x32xf32>,
    return
  }
  func.func @transform_0(%arg0: i32, %arg1: i32) -> (i32, i32, i32) {
    %c0_i32 = arith.constant 0 : i32
    %c0_i32_0 = arith.constant 0 : i32
    return %arg0, %arg1, %c0_i32 : i32, i32, i32
  }
  func.func @transform_1(%arg0: i32, %arg1: i32) -> (i32, i32, i32) {
    %c0_i32 = arith.constant 0 : i32
    %c0_i32_0 = arith.constant 0 : i32
    %c0_i32_1 = arith.constant 0 : i32
    return %arg0, %c0_i32, %c0_i32_0 : i32, i32, i32
  }
  func.func @transform_2(%arg0: i32, %arg1: i32) -> (i32, i32) {
    %c0_i32 = arith.constant 0 : i32
    %c0_i32_0 = arith.constant 0 : i32
    %c0_i32_1 = arith.constant 0 : i32
    return %c0_i32, %c0_i32_0 : i32, i32
  }
  func.func @transform_3(%arg0: i32, %arg1: i32) -> (i32, i32) {
    %c0_i32 = arith.constant 0 : i32
    %c0_i32_0 = arith.constant 0 : i32
    %c0_i32_1 = arith.constant 0 : i32
    return %c0_i32, %c0_i32_0 : i32, i32
  }
  func.func @transform_4(%arg0: i32, %arg1: i32) -> (i32, i32) {
    %c0_i32 = arith.constant 0 : i32
    %c0_i32_0 = arith.constant 0 : i32
    %c0_i32_1 = arith.constant 0 : i32
    return %c0_i32, %c0_i32_0 : i32, i32
  }
  func.func @transform_5(%arg0: i32, %arg1: i32) -> (i32, i32) {
    %c0_i32 = arith.constant 0 : i32
    %c0_i32_0 = arith.constant 0 : i32
    %c0_i32_1 = arith.constant 0 : i32
    return %c0_i32, %c0_i32_0 : i32, i32
  }
  func.func @transform_6(%arg0: i32, %arg1: i32) -> (i32, i32, i32) {
    %c0_i32 = arith.constant 0 : i32
    %c0_i32_0 = arith.constant 0 : i32
    return %arg0, %arg1, %c0_i32 : i32, i32, i32
  }
}

</mosaic_0001>

<llo_original>
// kernel: tpu_custom_call.1
$region0: #{tpu_custom_call.1}
  #allocation0 [shape = 'u32[]', space=smem, size = 0x4, offset = 0x4, fixed_abs, tag = 'smem constant byte address 0x4 - core index']
  #allocation1 [shape = 'u32[72,128]{1,0:T(1,128)}', space=vmem, size = 0x9000, scoped, tag = 'internal scratch']
  %s0 = inlined_call_operand.hbm [shape: f32[2,8,32], index: 0, kind: input, shape index: {}]
  %s1 = inlined_call_operand.hbm [shape: f32[2,8,32], index: 1, kind: input, shape index: {}]
  %s2 = inlined_call_operand.hbm [shape: f32[32,32], index: 2, kind: input, shape index: {}]
  %s3 = inlined_call_operand.hbm [shape: f32[32,64], index: 3, kind: input, shape index: {}]
  %s4 = inlined_call_operand.hbm [shape: f32[32,32], index: 4, kind: input, shape index: {}]
  %s5 = inlined_call_operand.vmem [shape: f32[1,32], index: 5, kind: input, shape index: {}]
  %s6 = inlined_call_operand.hbm [shape: f32[2,8,32], index: 6, kind: output, shape index: {}]
  %s7 = sld [smem:[#allocation0]]
  $region77: #{tpu_custom_call.1} parent=0
    _
  %s9 = ssub.s32 1, %s7
  %s10 = scalar_select 0, %s9, %s7
  $region1: #{tpu_custom_call.1} parent=0
    #allocation2 [shape = 'u8[8192]{0}', space=vmem, size = 0x2000, scoped, tag = 'input window, operand 0']
    #allocation3 [shape = 's32[2]{0}', space=sflag, size = 0x8, scoped, tag = 'scoped memory for tpu_custom_call.1']
    #allocation4 [shape = 's32[2]{0}', space=sflag, size = 0x8, scoped, tag = 'scoped memory for tpu_custom_call.1']
    #allocation5 [shape = 'u8[8192]{0}', space=vmem, size = 0x2000, scoped, tag = 'input window, operand 1']
    #allocation6 [shape = 's32[2]{0}', space=sflag, size = 0x8, scoped, tag = 'scoped memory for tpu_custom_call.1']
    #allocation7 [shape = 'u8[16384]{0}', space=vmem, size = 0x4000, scoped, tag = 'input window, operand 2, single buffered']
    #allocation8 [shape = 'u8[16384]{0}', space=vmem, size = 0x4000, scoped, tag = 'input window, operand 3, single buffered']
    #allocation9 [shape = 's32[1]{0}', space=sflag, size = 0x4, scoped, tag = 'scoped memory for tpu_custom_call.1']
    #allocation10 [shape = 'u8[16384]{0}', space=vmem, size = 0x4000, scoped, tag = 'input window, operand 4, single buffered']
    #allocation11 [shape = 'u8[8192]{0}', space=vmem, size = 0x2000, scoped, tag = 'output window, operand 0']
    %11 = vsyncpa [#allocation3], 0
    %s12 = scalar_lea.sflag [#allocation3], 1
    %13 = vsyncpa %s12, 0
    %14 = vsyncpa [#allocation6], 0
    %s15 = scalar_lea.sflag [#allocation6], 1
    %16 = vsyncpa %s15, 0
    %17 = vsyncpa [#allocation9], 0
    %18 = vsyncpa [#allocation4], 0
    %s19 = scalar_lea.sflag [#allocation4], 1
    %20 = vsyncpa %s19, 0
    loop: start=0, step=1, limit=4
    $region2: #{tpu_custom_call.1} parent=1 // loop_pre_header
      _
    $region3: #{tpu_custom_call.1} parent=1 // loop_header
      %s22 = sphi 0, %s26
      %p23 = scmp.ge.s32.totalorder %s22, 4
      %s29 = sphi 0, %s41
      %s30 = sphi 0, %s37
      %s31 = sphi 0, %s29
      %s32 = sphi 0, %s30
      %s33 = sphi 0, %s31
      %s34 = sphi 0, %s32
      %s46 = sphi 0, %s48
      %s49 = sphi 0, %s46
      %s50 = sphi 0, %s49
      %s66 = sphi 0, %s50
      %s72 = sphi 0, %s74
      %s75 = sphi 0, %s72
      %s76 = sphi 0, %s75
      %s92 = sphi 0, %s76
      %s96 = sphi 0, %s96
      %s98 = sphi 0, %s96
      %s99 = sphi 0, %s98
      %s113 = sphi 0, %s99
      %s117 = sphi 0, %s117
      %s119 = sphi 0, %s117
      %s120 = sphi 0, %s119
      %s134 = sphi 0, %s120
      %s138 = sphi 0, %s138
      %s140 = sphi 0, %s138
      %s141 = sphi 0, %s140
      %s155 = sphi 0, %s141
      %s159 = sphi 0, %s159
      %s161 = sphi 0, %s159
      %s162 = sphi 0, %s161
      %s176 = sphi 0, %s162
      %s184 = sphi 0, %s186
      %s187 = sphi 0, %s184
      %s188 = sphi 0, %s187
      %s204 = sphi 0, %s188
    $region4: #{tpu_custom_call.1} parent=1 // loop_header_branch
      %25 = sbr.rel (%p23) target = $region8
    $region5: #{tpu_custom_call.1} parent=1 // loop_body
      %s27 = ssub.s32 %s22, 1
      %s28 = ssub.s32 %s22, 2
      %s35 = sadd.s32 1, %s30
      %p36 = scmp.ge.s32.totalorder %s35, 1
      %s37 = scalar_select %p36, 0, %s35
      %s38 = sadd.s32 1, %s29
      %s39 = scalar_select %p36, %s38, %s29
      %p40 = scmp.ge.s32.totalorder %s39, 2
      %s41 = scalar_select %p40, 0, %s39
      %s42 = ssub.s32 %s29, %s41
      %s43 = ssub.s32 %s30, %s37
      %s44 = sor.u32 %s42, %s43
      %p45 = scmp.eq.s32.totalorder %s44, 0
      %s47 = sadd.s32 %s46, 1
      %s48 = scalar_select %p45, %s46, %s47
      %p51 = pneg %p45
      %p52 = scmp.eq.s32.totalorder %s22, 1
      %p53 = por %p51, %p52
      %p54 = scmp.ne.s32.totalorder %s46, %s49
      %p55 = scmp.eq.s32.totalorder %s22, 0
      %p56 = por %p54, %p55
      %p57 = scmp.ne.s32.totalorder %s46, %s49
      %p58 = scmp.eq.s32.totalorder %s27, 1
      %p59 = por %p57, %p58
      %p60 = scmp.ne.s32.totalorder %s49, %s50
      %p61 = scmp.eq.s32.totalorder %s27, 0
      %p62 = por %p60, %p61
      %p63 = scmp.ne.s32.totalorder %s49, %s50
      %p64 = scmp.eq.s32.totalorder %s28, 1
      %p65 = por %p63, %p64
      %p67 = scmp.ne.s32.totalorder %s50, %s66
      %p68 = scmp.eq.s32.totalorder %s28, 0
      %p69 = por %p67, %p68
      %s70 = ssub.s32 %s29, %s41
      %p71 = scmp.eq.s32.totalorder %s70, 0
      %s73 = sadd.s32 %s72, 1
      %s74 = scalar_select %p71, %s72, %s73
      %p77 = pneg %p71
      %p78 = scmp.eq.s32.totalorder %s22, 1
      %p79 = por %p77, %p78
      %p80 = scmp.ne.s32.totalorder %s72, %s75
      %p81 = scmp.eq.s32.totalorder %s22, 0
      %p82 = por %p80, %p81
      %p83 = scmp.ne.s32.totalorder %s72, %s75
      %p84 = scmp.eq.s32.totalorder %s27, 1
      %p85 = por %p83, %p84
      %p86 = scmp.ne.s32.totalorder %s75, %s76
      %p87 = scmp.eq.s32.totalorder %s27, 0
      %p88 = por %p86, %p87
      %p89 = scmp.ne.s32.totalorder %s75, %s76
      %p90 = scmp.eq.s32.totalorder %s28, 1
      %p91 = por %p89, %p90
      %p93 = scmp.ne.s32.totalorder %s76, %s92
      %p94 = scmp.eq.s32.totalorder %s28, 0
      %p95 = por %p93, %p94
      %s97 = sadd.s32 %s96, 1
      %p100 = scmp.eq.s32.totalorder %s22, 1
      %p101 = scmp.ne.s32.totalorder %s96, %s98
      %p102 = scmp.eq.s32.totalorder %s22, 0
      %p103 = por %p101, %p102
      %p104 = scmp.ne.s32.totalorder %s96, %s98
      %p105 = scmp.eq.s32.totalorder %s27, 1
      %p106 = por %p104, %p105
      %p107 = scmp.ne.s32.totalorder %s98, %s99
      %p108 = scmp.eq.s32.totalorder %s27, 0
      %p109 = por %p107, %p108
      %p110 = scmp.ne.s32.totalorder %s98, %s99
      %p111 = scmp.eq.s32.totalorder %s28, 1
      %p112 = por %p110, %p111
      %p114 = scmp.ne.s32.totalorder %s99, %s113
      %p115 = scmp.eq.s32.totalorder %s28, 0
      %p116 = por %p114, %p115
      %s118 = sadd.s32 %s117, 1
      %p121 = scmp.eq.s32.totalorder %s22, 1
      %p122 = scmp.ne.s32.totalorder %s117, %s119
      %p123 = scmp.eq.s32.totalorder %s22, 0
      %p124 = por %p122, %p123
      %p125 = scmp.ne.s32.totalorder %s117, %s119
      %p126 = scmp.eq.s32.totalorder %s27, 1
      %p127 = por %p125, %p126
      %p128 = scmp.ne.s32.totalorder %s119, %s120
      %p129 = scmp.eq.s32.totalorder %s27, 0
      %p130 = por %p128, %p129
      %p131 = scmp.ne.s32.totalorder %s119, %s120
      %p132 = scmp.eq.s32.totalorder %s28, 1
      %p133 = por %p131, %p132
      %p135 = scmp.ne.s32.totalorder %s120, %s134
      %p136 = scmp.eq.s32.totalorder %s28, 0
      %p137 = por %p135, %p136
      %s139 = sadd.s32 %s138, 1
      %p142 = scmp.eq.s32.totalorder %s22, 1
      %p143 = scmp.ne.s32.totalorder %s138, %s140
      %p144 = scmp.eq.s32.totalorder %s22, 0
      %p145 = por %p143, %p144
      %p146 = scmp.ne.s32.totalorder %s138, %s140
      %p147 = scmp.eq.s32.totalorder %s27, 1
      %p148 = por %p146, %p147
      %p149 = scmp.ne.s32.totalorder %s140, %s141
      %p150 = scmp.eq.s32.totalorder %s27, 0
      %p151 = por %p149, %p150
      %p152 = scmp.ne.s32.totalorder %s140, %s141
      %p153 = scmp.eq.s32.totalorder %s28, 1
      %p154 = por %p152, %p153
      %p156 = scmp.ne.s32.totalorder %s141, %s155
      %p157 = scmp.eq.s32.totalorder %s28, 0
      %p158 = por %p156, %p157
      %s160 = sadd.s32 %s159, 1
      %p163 = scmp.eq.s32.totalorder %s22, 1
      %p164 = scmp.ne.s32.totalorder %s159, %s161
      %p165 = scmp.eq.s32.totalorder %s22, 0
      %p166 = por %p164, %p165
      %p167 = scmp.ne.s32.totalorder %s159, %s161
      %p168 = scmp.eq.s32.totalorder %s27, 1
      %p169 = por %p167, %p168
      %p170 = scmp.ne.s32.totalorder %s161, %s162
      %p171 = scmp.eq.s32.totalorder %s27, 0
      %p172 = por %p170, %p171
      %p173 = scmp.ne.s32.totalorder %s161, %s162
      %p174 = scmp.eq.s32.totalorder %s28, 1
      %p175 = por %p173, %p174
      %p177 = scmp.ne.s32.totalorder %s162, %s176
      %p178 = scmp.eq.s32.totalorder %s28, 0
      %p179 = por %p177, %p178
      %s180 = ssub.s32 %s29, %s41
      %s181 = ssub.s32 %s30, %s37
      %s182 = sor.u32 %s180, %s181
      %p183 = scmp.eq.s32.totalorder %s182, 0
      %s185 = sadd.s32 %s184, 1
      %s186 = scalar_select %p183, %s184, %s185
      %p189 = pneg %p183
      %p190 = scmp.eq.s32.totalorder %s22, 1
      %p191 = por %p189, %p190
      %p192 = scmp.ne.s32.totalorder %s184, %s187
      %p193 = scmp.eq.s32.totalorder %s22, 0
      %p194 = por %p192, %p193
      %p195 = scmp.ne.s32.totalorder %s184, %s187
      %p196 = scmp.eq.s32.totalorder %s27, 1
      %p197 = por %p195, %p196
      %p198 = scmp.ne.s32.totalorder %s187, %s188
      %p199 = scmp.eq.s32.totalorder %s27, 0
      %p200 = por %p198, %p199
      %p201 = scmp.ne.s32.totalorder %s187, %s188
      %p202 = scmp.eq.s32.totalorder %s28, 1
      %p203 = por %p201, %p202
      %p205 = scmp.ne.s32.totalorder %s188, %s204
      %p206 = scmp.eq.s32.totalorder %s28, 0
      %p207 = por %p205, %p206
      %p208 = scmp.le.s32.totalorder 1, %s22
      %p209 = scmp.lt.s32.totalorder %s22, 3
      %p210 = pnand %p208, %p209
      %p211 = pneg %p210
      // Predicated region
      $region9: #{tpu_custom_call.1} parent=5 // pred_check
        _
      $region10: #{tpu_custom_call.1} parent=5 // pred_check_branch
        %213 = sbr.rel (%p210) target = $region12
      $region11: #{tpu_custom_call.1} parent=5 // pred_region
        %s214 = ssub.s32 %s22, 1
        // Predicated region
        $region13: #{tpu_custom_call.1} parent=11 // pred_check
          %p215 = pneg %p109
        $region14: #{tpu_custom_call.1} parent=11 // pred_check_branch
          %217 = sbr.rel (%p215) target = $region16
        $region15: #{tpu_custom_call.1} parent=11 // pred_region
          %219 = vsyncadd [#allocation6], 0
          %s220 = sshll.u32 %s2, 4
          %s221 = int_to_ptr.hbm [resolvable:$true] %s220
          %s222 = sshll.u32 [#allocation7], 4
          %s223 = int_to_ptr.vmem [resolvable:$true] %s222
          %228 = dma.hbm_to_vmem [thread:$0]  %s221, 512, %s223, [#allocation6], 128, 128, 8
        $region16: #{tpu_custom_call.1} parent=11 // pred_fallthru
          _
        // Predicated region
        $region17: #{tpu_custom_call.1} parent=11 // pred_check
          %p229 = pneg %p130
        $region18: #{tpu_custom_call.1} parent=11 // pred_check_branch
          %231 = sbr.rel (%p229) target = $region20
        $region19: #{tpu_custom_call.1} parent=11 // pred_region
          %233 = vsyncadd [#allocation9], 0
          %s234 = sshll.u32 %s3, 4
          %s235 = int_to_ptr.hbm [resolvable:$true] %s234
          %s236 = sshll.u32 [#allocation8], 4
          %s237 = int_to_ptr.vmem [resolvable:$true] %s236
          %242 = dma.hbm_to_vmem [thread:$0]  %s235, 512, %s237, [#allocation9], 128, 128, 8
        $region20: #{tpu_custom_call.1} parent=11 // pred_fallthru
          _
        // Predicated region
        $region21: #{tpu_custom_call.1} parent=11 // pred_check
          %p243 = pneg %p151
        $region22: #{tpu_custom_call.1} parent=11 // pred_check_branch
          %245 = sbr.rel (%p243) target = $region24
        $region23: #{tpu_custom_call.1} parent=11 // pred_region
          %247 = vsyncadd [#allocation9], 0
          %s248 = sshll.u32 %s4, 4
          %s249 = int_to_ptr.hbm [resolvable:$true] %s248
          %s250 = sshll.u32 [#allocation10], 4
          %s251 = int_to_ptr.vmem [resolvable:$true] %s250
          %256 = dma.hbm_to_vmem [thread:$0]  %s249, 512, %s251, [#allocation9], 128, 128, 8
        $region24: #{tpu_custom_call.1} parent=11 // pred_fallthru
          _
        // Predicated region
        $region25: #{tpu_custom_call.1} parent=11 // pred_check
          %p257 = pneg %p172
        $region26: #{tpu_custom_call.1} parent=11 // pred_check_branch
          %259 = sbr.rel (%p257) target = $region28
        $region27: #{tpu_custom_call.1} parent=11 // pred_region
          _
        $region28: #{tpu_custom_call.1} parent=11 // pred_fallthru
          _
      $region12: #{tpu_custom_call.1} parent=5 // pred_fallthru
        _
      %p260 = scmp.lt.s32.totalorder %s22, 2
      // Predicated region
      $region29: #{tpu_custom_call.1} parent=5 // pred_check
        %p261 = pneg %p260
      $region30: #{tpu_custom_call.1} parent=5 // pred_check_branch
        %263 = sbr.rel (%p261) target = $region32
      $region31: #{tpu_custom_call.1} parent=5 // pred_region
        // Predicated region
        $region33: #{tpu_custom_call.1} parent=31 // pred_check
          %p264 = pneg %p56
        $region34: #{tpu_custom_call.1} parent=31 // pred_check_branch
          %266 = sbr.rel (%p264) target = $region36
        $region35: #{tpu_custom_call.1} parent=31 // pred_region
          %s267 = sand.u32 %s46, 1
          %s268 = scalar_lea.sflag [#allocation3], %s267
          %s269 = sand.u32 %s46, 1
          %s270 = smul.addr %s269, 8
          %s271 = scalar_lea.vmem [#allocation2], %s270
          %273 = vsyncadd %s268, 0
          %s274 = sadd.s32 %s30, %s29
          %s275 = smul.addr %s274, 8
          %s276 = scalar_lea.hbm %s0, %s275
          %s278 = sshll.u32 %s276, 4
          %s279 = int_to_ptr.hbm [resolvable:$true] %s278
          %s280 = sshll.u32 %s271, 4
          %s281 = int_to_ptr.vmem [resolvable:$true] %s280
          %283 = dma.hbm_to_vmem [thread:$0]  %s279, 128, %s281, %s268
        $region36: #{tpu_custom_call.1} parent=31 // pred_fallthru
          _
        // Predicated region
        $region37: #{tpu_custom_call.1} parent=31 // pred_check
          %p284 = pneg %p82
        $region38: #{tpu_custom_call.1} parent=31 // pred_check_branch
          %286 = sbr.rel (%p284) target = $region40
        $region39: #{tpu_custom_call.1} parent=31 // pred_region
          %s287 = sand.u32 %s22, 1
          %s288 = scalar_lea.sflag [#allocation6], %s287
          %s289 = sand.u32 %s72, 1
          %s290 = smul.addr %s289, 8
          %s291 = scalar_lea.vmem [#allocation5], %s290
          %293 = vsyncadd %s288, 0
          %s294 = smul.addr %s29, 8
          %s295 = scalar_lea.hbm %s1, %s294
          %s297 = sshll.u32 %s295, 4
          %s298 = int_to_ptr.hbm [resolvable:$true] %s297
          %s299 = sshll.u32 %s291, 4
          %s300 = int_to_ptr.vmem [resolvable:$true] %s299
          %302 = dma.hbm_to_vmem [thread:$0]  %s298, 128, %s300, %s288
        $region40: #{tpu_custom_call.1} parent=31 // pred_fallthru
          _
      $region32: #{tpu_custom_call.1} parent=5 // pred_fallthru
        _
      %p303 = scmp.le.s32.totalorder 1, %s22
      %p304 = scmp.lt.s32.totalorder %s22, 3
      %p305 = pnand %p303, %p304
      %p306 = pneg %p305
      // Predicated region
      $region41: #{tpu_custom_call.1} parent=5 // pred_check
        _
      $region42: #{tpu_custom_call.1} parent=5 // pred_check_branch
        %308 = sbr.rel (%p305) target = $region44
      $region43: #{tpu_custom_call.1} parent=5 // pred_region
        %s309 = ssub.s32 %s22, 1
        %s310 = sand.u32 %s49, 1
        %s311 = scalar_lea.sflag [#allocation3], %s310
        %s312 = sand.u32 %s49, 1
        %s313 = smul.addr %s312, 8
        %s314 = scalar_lea.vmem [#allocation2], %s313
        // Predicated region
        $region45: #{tpu_custom_call.1} parent=43 // pred_check
          %p315 = pneg %p62
        $region46: #{tpu_custom_call.1} parent=43 // pred_check_branch
          %317 = sbr.rel (%p315) target = $region48
        $region47: #{tpu_custom_call.1} parent=43 // pred_region
          %319 = dma.done %s311, 128
        $region48: #{tpu_custom_call.1} parent=43 // pred_fallthru
          _
        %s320 = sand.u32 %s27, 1
        %s321 = scalar_lea.sflag [#allocation6], %s320
        %s322 = sand.u32 %s75, 1
        %s323 = smul.addr %s322, 8
        %s324 = scalar_lea.vmem [#allocation5], %s323
        // Predicated region
        $region49: #{tpu_custom_call.1} parent=43 // pred_check
          %p325 = pneg %p88
        $region50: #{tpu_custom_call.1} parent=43 // pred_check_branch
          %327 = sbr.rel (%p325) target = $region52
        $region51: #{tpu_custom_call.1} parent=43 // pred_region
          %329 = dma.done %s321, 128
        $region52: #{tpu_custom_call.1} parent=43 // pred_fallthru
          _
        // Predicated region
        $region53: #{tpu_custom_call.1} parent=43 // pred_check
          %p330 = pneg %p109
        $region54: #{tpu_custom_call.1} parent=43 // pred_check_branch
          %332 = sbr.rel (%p330) target = $region56
        $region55: #{tpu_custom_call.1} parent=43 // pred_region
          %334 = dma.done [#allocation6], 512
        $region56: #{tpu_custom_call.1} parent=43 // pred_fallthru
          _
        // Predicated region
        $region57: #{tpu_custom_call.1} parent=43 // pred_check
          %p335 = pneg %p130
        $region58: #{tpu_custom_call.1} parent=43 // pred_check_branch
          %337 = sbr.rel (%p335) target = $region60
        $region59: #{tpu_custom_call.1} parent=43 // pred_region
          %339 = dma.done [#allocation9], 512
        $region60: #{tpu_custom_call.1} parent=43 // pred_fallthru
          _
        // Predicated region
        $region61: #{tpu_custom_call.1} parent=43 // pred_check
          %p340 = pneg %p151
        $region62: #{tpu_custom_call.1} parent=43 // pred_check_branch
          %342 = sbr.rel (%p340) target = $region64
        $region63: #{tpu_custom_call.1} parent=43 // pred_region
          %344 = dma.done [#allocation9], 512
        $region64: #{tpu_custom_call.1} parent=43 // pred_fallthru
          _
        %s345 = sand.u32 %s49, 1
        %s346 = scalar_lea.sflag [#allocation3], %s345
        %s347 = sand.u32 %s49, 1
        %s348 = smul.addr %s347, 8
        %s349 = scalar_lea.vmem [#allocation2], %s348
        %p350 = pneg %p62
        %p351 = pneg %p59
        %s352 = sand.u32 %s27, 1
        %s353 = scalar_lea.sflag [#allocation6], %s352
        %s354 = sand.u32 %s75, 1
        %s355 = smul.addr %s354, 8
        %s356 = scalar_lea.vmem [#allocation5], %s355
        %p357 = pneg %p88
        %p358 = pneg %p85
        %p359 = pneg %p109
        %p360 = pneg %p106
        %p361 = pneg %p130
        %p362 = pneg %p127
        %p363 = pneg %p151
        %p364 = pneg %p148
        %p365 = pneg %p172
        %p366 = pneg %p169
        %p367 = pneg %p200
        %p368 = pneg %p197
        %s369 = sand.u32 %s187, 1
        %s370 = scalar_lea.sflag [#allocation4], %s369
        %s371 = sand.u32 %s187, 1
        %s372 = smul.addr %s371, 8
        %s373 = scalar_lea.vmem [#allocation11], %s372
        %v374 = vld [vmem:[%s314] sm:$0xff]
        %v375 = vld [vmem:[%s324] sm:$0xff]
        %v376 = vld [vmem:[#allocation7] sm:$0xff]
        %v377 = vld [vmem:[#allocation7 + $0x8] sm:$0xff]
        %v378 = vld [vmem:[#allocation7 + $0x10] sm:$0xff]
        %v379 = vld [vmem:[#allocation7 + $0x18] sm:$0xff]
        %vm380 = vcmask 261120
        %v382 = vsel %vm380, %v374, 0
        %384 = vmatpush.msra.mxu0 0.0
        %385 = vmatpush.msra.mxu0 0.0
        %386 = vmatpush.msra.mxu0 0.0
        %387 = vmatpush.msra.mxu0 0.0
        %388 = vmatpush.msra.mxu0 0.0
        %389 = vmatpush.msra.mxu0 0.0
        %390 = vmatpush.msra.mxu0 0.0
        %391 = vmatpush.msra.mxu0 0.0
        %392 = vmatpush.msra.mxu0 0.0
        %393 = vmatpush.msra.mxu0 0.0
        %394 = vmatpush.msra.mxu0 0.0
        %395 = vmatpush.msra.mxu0 0.0
        %396 = vmatpush.msra.mxu0 %v379
        %397 = vmatpush.msra.mxu0 %v378
        %398 = vmatpush.msra.mxu0 %v377
        %399 = vmatpush.msra.mxu0 %v376
        %400 = vmatmul.f32.gmra.mxu0 %v382
        %v401 = vpop.f32.mrf.mxu0
        %v402 = vadd.f32 0.0, %v401
        %403 = vdwg.mxu0
        %v404 = vld [vmem:[#allocation8] sm:$0xff]
        %v405 = vld [vmem:[#allocation8 + $0x8] sm:$0xff]
        %v406 = vld [vmem:[#allocation8 + $0x10] sm:$0xff]
        %v407 = vld [vmem:[#allocation8 + $0x18] sm:$0xff]
        %v409 = vsel %vm380, %v375, 0
        %411 = vmatpush.msra.mxu0 0.0
        %412 = vmatpush.msra.mxu0 0.0
        %413 = vmatpush.msra.mxu0 0.0
        %414 = vmatpush.msra.mxu0 0.0
        %415 = vmatpush.msra.mxu0 0.0
        %416 = vmatpush.msra.mxu0 0.0
        %417 = vmatpush.msra.mxu0 0.0
        %418 = vmatpush.msra.mxu0 0.0
        %419 = vmatpush.msra.mxu0 0.0
        %420 = vmatpush.msra.mxu0 0.0
        %421 = vmatpush.msra.mxu0 0.0
        %422 = vmatpush.msra.mxu0 0.0
        %423 = vmatpush.msra.mxu0 %v407
        %424 = vmatpush.msra.mxu0 %v406
        %425 = vmatpush.msra.mxu0 %v405
        %426 = vmatpush.msra.mxu0 %v404
        %427 = vmatmul.f32.gmra.mxu0 %v409
        %v428 = vpop.f32.mrf.mxu0
        %v429 = vadd.f32 0.0, %v428
        %430 = vdwg.mxu0
        %vm431 = vcmask 130048
        %v433 = vsel %vm431, %v402, 0
        %v436 = vsel %vm431, %v429, 0
        %438 = vmatpush.xpose.msra.mxu0 0.0
        %439 = vmatpush.xpose.msra.mxu0 0.0
        %440 = vmatpush.xpose.msra.mxu0 0.0
        %441 = vmatpush.xpose.msra.mxu0 0.0
        %442 = vmatpush.xpose.msra.mxu0 0.0
        %443 = vmatpush.xpose.msra.mxu0 0.0
        %444 = vmatpush.xpose.msra.mxu0 0.0
        %445 = vmatpush.xpose.msra.mxu0 0.0
        %446 = vmatpush.xpose.msra.mxu0 0.0
        %447 = vmatpush.xpose.msra.mxu0 0.0
        %448 = vmatpush.xpose.msra.mxu0 0.0
        %449 = vmatpush.xpose.msra.mxu0 0.0
        %450 = vmatpush.xpose.msra.mxu0 0.0
        %451 = vmatpush.xpose.msra.mxu0 0.0
        %452 = vmatpush.xpose.msra.mxu0 0.0
        %453 = vmatpush.xpose.msra.mxu0 %v436
        %454 = vmatmul.f32.gmra.mxu0 %v433
        %v455 = vpop.f32.mrf.mxu0
        %v456 = vadd.f32 0.0, %v455
        %457 = vdwg.mxu0
        %vm458 = vcmask 64512
        %v459 = vsel %vm458, %v456, -inf
        %460 = vmax.xlane.f32.xlu0 %v459
        %v461 = vpop.xlane.xlu0 %460
        %v462 = vsub.f32 %v456, %v461
        %v463 = vmul.f32 %v462, 1.442695
        %v464 = vpow.pop %v463
        %v465 = vsel %vm458, %v464, 0.0
        %466 = vadd.xlane.f32.xlu0 %v465
        %v467 = vpop.xlane.xlu0 %466
        %468 = vrot.lane.b32.xlu0 %v429, 96
        %v469 = vpop.permute.xlu0 %468
        %v472 = vsel %vm458, %v464, 0
        %474 = vmatpush.msra.mxu0 0.0
        %475 = vmatpush.msra.mxu0 0.0
        %476 = vmatpush.msra.mxu0 0.0
        %477 = vmatpush.msra.mxu0 0.0
        %478 = vmatpush.msra.mxu0 0.0
        %479 = vmatpush.msra.mxu0 0.0
        %480 = vmatpush.msra.mxu0 0.0
        %481 = vmatpush.msra.mxu0 0.0
        %482 = vmatpush.msra.mxu0 0.0
        %483 = vmatpush.msra.mxu0 0.0
        %484 = vmatpush.msra.mxu0 0.0
        %485 = vmatpush.msra.mxu0 0.0
        %486 = vmatpush.msra.mxu0 0.0
        %487 = vmatpush.msra.mxu0 0.0
        %488 = vmatpush.msra.mxu0 0.0
        %489 = vmatpush.msra.mxu0 %v469
        %490 = vmatmul.f32.gmra.mxu0 %v472
        %v491 = vpop.f32.mrf.mxu0
        %v492 = vadd.f32 0.0, %v491
        %493 = vdwg.mxu0
        %v494 = vrcp.pop %v467
        %v495 = vmul.f32 %v467, %v494
        %v496 = vsub.f32 1.0, %v495
        %v497 = vmul.f32 %v494, %v496
        %v498 = vadd.f32 %v494, %v497
        %vm499 = vweird.f32 %v467
        %vm500 = vweird.f32 %v494
        %vm501 = vmor %vm499, %vm500
        %v502 = vsel %vm501, %v494, %v498
        %v503 = vand.u32 2147483647, %v467
        %vm504 = vcmp.eq.f32.partialorder %v503, 8.507059e+37
        %v505 = vand.u32 %v467, 2147483648
        %v506 = vor.u32 1.1754944e-38, %v505
        %v507 = vsel %vm504, %v506, %v502
        %v508 = vmul.f32 %v492, %v507
        %509 = vrot.lane.b32.xlu0 %v402, 112
        %v510 = vpop.permute.xlu0 %509
        %511 = vrot.lane.b32.xlu0 %v429, 112
        %v512 = vpop.permute.xlu0 %511
        %v513 = vsel %vm431, %v510, 0
        %v515 = vsel %vm431, %v512, 0
        %517 = vmatpush.xpose.msra.mxu0 0.0
        %518 = vmatpush.xpose.msra.mxu0 0.0
        %519 = vmatpush.xpose.msra.mxu0 0.0
        %520 = vmatpush.xpose.msra.mxu0 0.0
        %521 = vmatpush.xpose.msra.mxu0 0.0
        %522 = vmatpush.xpose.msra.mxu0 0.0
        %523 = vmatpush.xpose.msra.mxu0 0.0
        %524 = vmatpush.xpose.msra.mxu0 0.0
        %525 = vmatpush.xpose.msra.mxu0 0.0
        %526 = vmatpush.xpose.msra.mxu0 0.0
        %527 = vmatpush.xpose.msra.mxu0 0.0
        %528 = vmatpush.xpose.msra.mxu0 0.0
        %529 = vmatpush.xpose.msra.mxu0 0.0
        %530 = vmatpush.xpose.msra.mxu0 0.0
        %531 = vmatpush.xpose.msra.mxu0 0.0
        %532 = vmatpush.xpose.msra.mxu0 %v515
        %533 = vmatmul.f32.gmra.mxu0 %v513
        %v534 = vpop.f32.mrf.mxu0
        %v535 = vadd.f32 0.0, %v534
        %536 = vdwg.mxu0
        %v537 = vsel %vm458, %v535, -inf
        %538 = vmax.xlane.f32.xlu0 %v537
        %v539 = vpop.xlane.xlu0 %538
        %v540 = vsub.f32 %v535, %v539
        %v541 = vmul.f32 %v540, 1.442695
        %v542 = vpow.pop %v541
        %v543 = vsel %vm458, %v542, 0.0
        %544 = vadd.xlane.f32.xlu0 %v543
        %v545 = vpop.xlane.xlu0 %544
        %546 = vrot.lane.b32.xlu0 %v429, 80
        %v547 = vpop.permute.xlu0 %546
        %v550 = vsel %vm458, %v542, 0
        %552 = vmatpush.msra.mxu0 0.0
        %553 = vmatpush.msra.mxu0 0.0
        %554 = vmatpush.msra.mxu0 0.0
        %555 = vmatpush.msra.mxu0 0.0
        %556 = vmatpush.msra.mxu0 0.0
        %557 = vmatpush.msra.mxu0 0.0
        %558 = vmatpush.msra.mxu0 0.0
        %559 = vmatpush.msra.mxu0 0.0
        %560 = vmatpush.msra.mxu0 0.0
        %561 = vmatpush.msra.mxu0 0.0
        %562 = vmatpush.msra.mxu0 0.0
        %563 = vmatpush.msra.mxu0 0.0
        %564 = vmatpush.msra.mxu0 0.0
        %565 = vmatpush.msra.mxu0 0.0
        %566 = vmatpush.msra.mxu0 0.0
        %567 = vmatpush.msra.mxu0 %v547
        %568 = vmatmul.f32.gmra.mxu0 %v550
        %v569 = vpop.f32.mrf.mxu0
        %v570 = vadd.f32 0.0, %v569
        %571 = vdwg.mxu0
        %v572 = vrcp.pop %v545
        %v573 = vmul.f32 %v545, %v572
        %v574 = vsub.f32 1.0, %v573
        %v575 = vmul.f32 %v572, %v574
        %v576 = vadd.f32 %v572, %v575
        %vm577 = vweird.f32 %v545
        %vm578 = vweird.f32 %v572
        %vm579 = vmor %vm577, %vm578
        %v580 = vsel %vm579, %v572, %v576
        %v581 = vand.u32 2147483647, %v545
        %vm582 = vcmp.eq.f32.partialorder %v581, 8.507059e+37
        %v583 = vand.u32 %v545, 2147483648
        %v584 = vor.u32 1.1754944e-38, %v583
        %v585 = vsel %vm582, %v584, %v580
        %v586 = vmul.f32 %v570, %v585
        %588 = vrot.lane.b32.xlu0 %v586, 16
        %v589 = vpop.permute.xlu0 %588
        %v591 = vsel %vm431, %v508, %v589
        %v592 = vld [vmem:[#allocation10] sm:$0xff]
        %v593 = vld [vmem:[#allocation10 + $0x8] sm:$0xff]
        %v594 = vld [vmem:[#allocation10 + $0x10] sm:$0xff]
        %v595 = vld [vmem:[#allocation10 + $0x18] sm:$0xff]
        %v596 = vld [vmem:[%s5] sm:$0x1]
        %v598 = vperm.slane %v596, 0
        %v601 = vsel %vm380, %v591, 0
        %603 = vmatpush.msra.mxu0 0.0
        %604 = vmatpush.msra.mxu0 0.0
        %605 = vmatpush.msra.mxu0 0.0
        %606 = vmatpush.msra.mxu0 0.0
        %607 = vmatpush.msra.mxu0 0.0
        %608 = vmatpush.msra.mxu0 0.0
        %609 = vmatpush.msra.mxu0 0.0
        %610 = vmatpush.msra.mxu0 0.0
        %611 = vmatpush.msra.mxu0 0.0
        %612 = vmatpush.msra.mxu0 0.0
        %613 = vmatpush.msra.mxu0 0.0
        %614 = vmatpush.msra.mxu0 0.0
        %615 = vmatpush.msra.mxu0 %v595
        %616 = vmatpush.msra.mxu0 %v594
        %617 = vmatpush.msra.mxu0 %v593
        %618 = vmatpush.msra.mxu0 %v592
        %619 = vmatmul.f32.gmra.mxu0 %v601
        %v620 = vpop.f32.mrf.mxu0
        %v621 = vadd.f32 %v598, %v620
        %622 = vdwg.mxu0
        %623 = vst.msk [vmem:[%s373] sm:$0xff] %vm380, %v621
        %s624 = sand.u32 %s187, 1
        %s625 = scalar_lea.sflag [#allocation4], %s624
        %s626 = sand.u32 %s187, 1
        %s627 = smul.addr %s626, 8
        %s628 = scalar_lea.vmem [#allocation11], %s627
        // Predicated region
        $region65: #{tpu_custom_call.1} parent=43 // pred_check
          %p629 = pneg %p197
        $region66: #{tpu_custom_call.1} parent=43 // pred_check_branch
          %631 = sbr.rel (%p629) target = $region68
        $region67: #{tpu_custom_call.1} parent=43 // pred_region
          %633 = vsyncadd %s625, 0
          %s634 = sadd.s32 %s32, %s31
          %s635 = smul.addr %s634, 8
          %s636 = scalar_lea.hbm %s6, %s635
          %s638 = sshll.u32 %s628, 4
          %s639 = int_to_ptr.vmem [resolvable:$true] %s638
          %s640 = sshll.u32 %s636, 4
          %s641 = int_to_ptr.hbm [resolvable:$true] %s640
          %643 = dma.vmem_to_hbm [thread:$0]  %s639, 128, %s641, %s625
        $region68: #{tpu_custom_call.1} parent=43 // pred_fallthru
          _
      $region44: #{tpu_custom_call.1} parent=5 // pred_fallthru
        _
      %p644 = scmp.le.s32.totalorder 2, %s22
      // Predicated region
      $region69: #{tpu_custom_call.1} parent=5 // pred_check
        %p645 = pneg %p644
      $region70: #{tpu_custom_call.1} parent=5 // pred_check_branch
        %647 = sbr.rel (%p645) target = $region72
      $region71: #{tpu_custom_call.1} parent=5 // pred_region
        %s648 = ssub.s32 %s22, 2
        // Predicated region
        $region73: #{tpu_custom_call.1} parent=71 // pred_check
          %p649 = pneg %p203
        $region74: #{tpu_custom_call.1} parent=71 // pred_check_branch
          %651 = sbr.rel (%p649) target = $region76
        $region75: #{tpu_custom_call.1} parent=71 // pred_region
          %s652 = sand.u32 %s188, 1
          %s653 = scalar_lea.sflag [#allocation4], %s652
          %s654 = sand.u32 %s188, 1
          %s655 = smul.addr %s654, 8
          %s656 = scalar_lea.vmem [#allocation11], %s655
          %658 = dma.done %s653, 128
        $region76: #{tpu_custom_call.1} parent=71 // pred_fallthru
          _
      $region72: #{tpu_custom_call.1} parent=5 // pred_fallthru
        _
    $region6: #{tpu_custom_call.1} parent=1 // loop_footer
      %s26 = sadd.s32 1, %s22
    $region7: #{tpu_custom_call.1} parent=1 // loop_footer_branch
      %21 = sbr.rel target = $region3
    $region8: #{tpu_custom_call.1} parent=1 // loop_exit
      _
    %659 = vsyncpa [#allocation3], 1
    %s660 = scalar_lea.sflag [#allocation3], 1
    %661 = vsyncpa %s660, 1
    %662 = vsyncpa [#allocation6], 1
    %s663 = scalar_lea.sflag [#allocation6], 1
    %664 = vsyncpa %s663, 1
    %665 = vsyncpa [#allocation9], 1
    %666 = vsyncpa [#allocation4], 1
    %s667 = scalar_lea.sflag [#allocation4], 1
    %668 = vsyncpa %s667, 1

</llo_original>
